<compile_context>
chip_gen: v6e
topology: v6e:2x2x1
jax: 0.10.0
libtpu: 0.0.40
codegen_flags: <defaults>
</compile_context>

<pallas_src>
import jax
import jax.numpy as jnp
from jax.experimental import pallas as pl
from jax.experimental.pallas import tpu as pltpu


def _cdiv(a, b):
    return -(-a // b)


def _round_up(a, b):
    return _cdiv(a, b) * b


def _tpu_config():
    """Per-generation tuning: (tile byte budget per input, base vmem limit, nchunks, is_v7)."""
    kind = ""
    try:
        kind = jax.devices()[0].device_kind.lower()
    except Exception:
        pass
    is_v7 = ("v7" in kind) or ("7x" in kind)
    if "v6" in kind:
        tile_budget, vmem_limit = 8 << 20, 64 << 20   # 128 MiB physical VMEM, go big
    elif "v5" in kind:
        tile_budget, vmem_limit = 4 << 20, 64 << 20   # default scoped VMEM is only 16 MiB
    elif is_v7:
        tile_budget, vmem_limit = 4 << 20, 48 << 20   # only 64 MiB physical per TC
    else:
        tile_budget, vmem_limit = 4 << 20, None
    nchunks = 2 if is_v7 else 1                       # 2 TCs only on v7x
    return tile_budget, vmem_limit, nchunks, is_v7


def _fused_sse_kernel(yhat_ref, y_ref, m0_ref, m1_ref, out_ref):
    """Accumulate both channel-group SSEs of one (tile_rows, H*W) row tile.

    out_ref block is (2, 8, 128) and stays VMEM-resident across the whole step
    (reduction) axis; out_ref[g] holds group g's partial SSE broadcast over all
    1024 lanes (the wrapper reads element [0, 0]).
    """
    @pl.when(pl.program_id(1) == 0)
    def _init():
        out_ref[...] = jnp.zeros_like(out_ref)

    # Upcast AFTER the load, BEFORE the subtraction (keeps f32 cancellation).
    d = y_ref[...].astype(jnp.float32) - yhat_ref[...].astype(jnp.float32)
    d2 = d * d                                     # (tile_rows, L) f32

    g0 = m0_ref[...] > 0.5                         # (tile_rows, 1) bool: channels [:3]
    g1 = m1_ref[...] > 0.5                         # (tile_rows, 1) bool: channels [3:]
    # where-select (not multiply): ragged-tail garbage rows may hold inf/NaN
    # and 0 * NaN would corrupt the accumulation.
    s0 = jnp.sum(jnp.where(g0, d2, 0.0))
    s1 = jnp.sum(jnp.where(g1, d2, 0.0))

    out_ref[0] += s0                               # scalar broadcast over (8, 128)
    out_ref[1] += s1


def rmse_weighted_loss(yhat, y, eps=1e-6, beta=10.0):
    assert yhat.shape == y.shape and yhat.ndim == 4
    B, C, H, W = yhat.shape
    assert C > 3, "module splits channels into [:3] and [3:]"

    R, L = B * C, H * W
    # Free, contiguous reshapes: zero extra HBM traffic.
    yhat2d = yhat.reshape(R, L)
    y2d = y.reshape(R, L)

    itemsize = jnp.dtype(yhat.dtype).itemsize
    row_align = {1: 32, 2: 16}.get(itemsize, 8)    # native sublane packing per dtype

    tile_budget, vmem_limit, nchunks, is_v7 = _tpu_config()
    bytes_per_row = L * itemsize
    rows_budget = max(row_align,
                      (tile_budget // max(1, bytes_per_row)) // row_align * row_align)

    def _plan(nc):
        rpc = _cdiv(R, nc)
        if nc == 1 and rpc <= rows_budget:
            return R, 1                            # single full-height block (equals the dim)
        tr = min(rows_budget, _round_up(rpc, row_align))
        return tr, _cdiv(rpc, tr)

    tile_rows, steps = _plan(nchunks)
    # Never let a block's start row land past the end of the data.
    if nchunks > 1 and (nchunks * steps - 1) * tile_rows >= R:
        nchunks = 1
        tile_rows, steps = _plan(1)

    if nchunks == 2 and is_v7 and hasattr(pltpu, "CORE_PARALLEL") and hasattr(pltpu, "ARBITRARY"):
        dim_sems = (pltpu.CORE_PARALLEL, pltpu.ARBITRARY)   # real 2-TC sharding on v7x
    else:
        dim_sems = ("parallel", "arbitrary")

    r_pad = nchunks * steps * tile_rows

    # Tiny per-row group/validity masks (r_pad rows -> a few KiB of HBM at most).
    rows_idx = jnp.arange(r_pad, dtype=jnp.int32)
    chan = rows_idx % C                            # row r of (B*C, L) has channel r % C
    valid = rows_idx < R
    mask0 = jnp.where(valid & (chan < 3), 1.0, 0.0).astype(jnp.float32).reshape(r_pad, 1)
    mask1 = jnp.where(valid & (chan >= 3), 1.0, 0.0).astype(jnp.float32).reshape(r_pad, 1)

    data_spec = pl.BlockSpec((tile_rows, L), lambda c, i: (c * steps + i, 0))
    mask_spec = pl.BlockSpec((tile_rows, 1), lambda c, i: (c * steps + i, 0))
    out_spec = pl.BlockSpec((None, 2, 8, 128), lambda c, i: (c, 0, 0, 0))

    # Make sure scoped VMEM covers 2 inputs x 2 pipeline buffers of the chosen tile.
    tile_bytes = tile_rows * L * itemsize
    vmem_needed = 4 * tile_bytes + (2 << 20)
    if vmem_limit is not None:
        vmem_limit = max(vmem_limit, vmem_needed)
    elif vmem_needed > (24 << 20):
        vmem_limit = vmem_needed + (4 << 20)

    covered = r_pad * L
    cost = pl.CostEstimate(
        flops=4 * covered,
        transcendentals=0,
        bytes_accessed=2 * covered * itemsize + 2 * r_pad * 4 + nchunks * 2 * 8 * 128 * 4,
    )

    partials = pl.pallas_call(
        _fused_sse_kernel,
        grid=(nchunks, steps),
        in_specs=[data_spec, data_spec, mask_spec, mask_spec],
        out_specs=out_spec,
        out_shape=jax.ShapeDtypeStruct((nchunks, 2, 8, 128), jnp.float32),
        compiler_params=pltpu.CompilerParams(
            dimension_semantics=dim_sems,
            vmem_limit_bytes=vmem_limit),
        cost_estimate=cost,
    )(yhat2d, y2d, mask0, mask1)

    # Every lane of partials[c, g] holds the same partial sum; fold the chunks.
    sse = jnp.sum(partials[:, :, 0, 0], axis=0)    # (2,)
    n1 = B * 3 * H * W
    n2 = B * (C - 3) * H * W
    mse1 = sse[0] / n1
    mse2 = sse[1] / n2

    # Scalar epilogue (plain-JAX glue): sqrt + beta weighting, matches torch exactly.
    return beta * jnp.sqrt(mse1 + eps) + jnp.sqrt(mse2 + eps)


if __name__ == "__main__":
    # No learnable parameters in this module; eps/beta are the defaults.
    key = jax.random.PRNGKey(0)
    k1, k2 = jax.random.split(key)
    yhat = jax.random.normal(k1, (2, 6, 16, 16), dtype=jnp.float32)
    y = jax.random.normal(k2, (2, 6, 16, 16), dtype=jnp.float32)

    loss = jax.jit(rmse_weighted_loss)(yhat, y)
    loss = jax.block_until_ready(loss)

    # pure-JAX reference for verification
    eps, beta = 1e-6, 10.0
    ref_mse1 = jnp.mean((y[:, :3] - yhat[:, :3]) ** 2)
    ref_mse2 = jnp.mean((y[:, 3:] - yhat[:, 3:]) ** 2)
    ref = beta * jnp.sqrt(ref_mse1 + eps) + jnp.sqrt(ref_mse2 + eps)

    assert jnp.allclose(loss, ref, rtol=1e-5, atol=1e-5), (loss, ref)
    print("KERNEL_OK")
</pallas_src>

<mosaic_0001>
module attributes {stable_mosaic.version = 11 : i64} {
  func.func @_fused_sse_kernel(%arg0: i32, %arg1: i32, %arg2: memref<12x256xf32, #tpu.memory_space<vmem>>, %arg3: memref<12x256xf32, #tpu.memory_space<vmem>>, %arg4: memref<12x1xf32, #tpu.memory_space<vmem>>, %arg5: memref<12x1xf32, #tpu.memory_space<vmem>>, %arg6: memref<1x2x8x128xf32, #tpu.memory_space<vmem>>) attributes {dimension_semantics = [#tpu.dimension_semantics<parallel>, #tpu.dimension_semantics<arbitrary>], iteration_bounds = array<i64: 1, 1>, scalar_prefetch = 0 : i64, scratch_operands = 0 : i64, tpu.core_type = #tpu.core_type<tc>, window_params = [{transform_indices = @transform_0, window_bounds = array<i64: 12, 256>}, {transform_indices = @transform_1, window_bounds = array<i64: 12, 256>}, {transform_indices = @transform_2, window_bounds = array<i64: 12, 1>}, {transform_indices = @transform_3, window_bounds = array<i64: 12, 1>}, {transform_indices = @transform_4, window_bounds = array<i64: 1, 2, 8, 128>}]} {
    %c0_i32 = arith.constant 0 : i32
    %0 = arith.cmpi eq, %arg1, %c0_i32 : i32
    %1 = arith.extui %0 : i1 to i32
    %c0_i32_0 = arith.constant 0 : i32
    %2 = arith.cmpi ne, %1, %c0_i32_0 : i32
    scf.if %2 {
      %cst_28 = arith.constant 0.000000e+00 : f32
      %43 = vector.broadcast %cst_28 : f32 to vector<2x8x128xf32>
      %c0_29 = arith.constant 0 : index
      %c0_30 = arith.constant 0 : index
      %c0_31 = arith.constant 0 : index
      %c0_32 = arith.constant 0 : index
      %44 = vector.load %arg6[%c0_29, %c0_30, %c0_31, %c0_32] : memref<1x2x8x128xf32, #tpu.memory_space<vmem>>, vector<1x2x8x128xf32>
      %45 = vector.shape_cast %44 : vector<1x2x8x128xf32> to vector<2x8x128xf32>
      %46 = vector.shape_cast %43 : vector<2x8x128xf32> to vector<1x2x8x128xf32>
      tpu.vector_store %arg6[%c0_29, %c0_30, %c0_31, %c0_32], %46 {strides = array<i32>} : memref<1x2x8x128xf32, #tpu.memory_space<vmem>>, vector<1x2x8x128xf32>,
    } else {
    }
    %c0 = arith.constant 0 : index
    %c0_1 = arith.constant 0 : index
    %3 = vector.load %arg3[%c0, %c0_1] : memref<12x256xf32, #tpu.memory_space<vmem>>, vector<12x256xf32>
    %c0_2 = arith.constant 0 : index
    %c0_3 = arith.constant 0 : index
    %4 = vector.load %arg2[%c0_2, %c0_3] : memref<12x256xf32, #tpu.memory_space<vmem>>, vector<12x256xf32>
    %5 = arith.subf %3, %4 : vector<12x256xf32>
    %6 = arith.mulf %5, %5 : vector<12x256xf32>
    %c0_4 = arith.constant 0 : index
    %c0_5 = arith.constant 0 : index
    %7 = vector.load %arg4[%c0_4, %c0_5] : memref<12x1xf32, #tpu.memory_space<vmem>>, vector<12x1xf32>
    %cst = arith.constant 5.000000e-01 : f32
    %8 = vector.broadcast %cst : f32 to vector<12x1xf32>
    %9 = arith.cmpf ogt, %7, %8 : vector<12x1xf32>
    %c0_6 = arith.constant 0 : index
    %c0_7 = arith.constant 0 : index
    %10 = vector.load %arg5[%c0_6, %c0_7] : memref<12x1xf32, #tpu.memory_space<vmem>>, vector<12x1xf32>
    %cst_8 = arith.constant 5.000000e-01 : f32
    %11 = vector.broadcast %cst_8 : f32 to vector<12x1xf32>
    %12 = arith.cmpf ogt, %10, %11 : vector<12x1xf32>
    %cst_9 = arith.constant 0.000000e+00 : f32
    %13 = vector.shape_cast %9 : vector<12x1xi1> to vector<12x1xi1>
    %14 = vector.broadcast %13 : vector<12x1xi1> to vector<12x256xi1>
    %15 = vector.broadcast %cst_9 : f32 to vector<12x256xf32>
    %16 = arith.select %14, %6, %15 : vector<12x256xi1>, vector<12x256xf32>
    %17 = vector.shape_cast %16 : vector<12x256xf32> to vector<1x12x256xf32>
    %cst_10 = arith.constant dense<0.000000e+00> : vector<1xf32>
    %18 = vector.multi_reduction <add>, %17, %cst_10 [1, 2] : vector<1x12x256xf32> to vector<1xf32>
    %19 = vector.shape_cast %18 : vector<1xf32> to vector<1x1x1xf32>
    %20 = vector.extract %19[0, 0, 0] : f32 from vector<1x1x1xf32>
    %cst_11 = arith.constant 0.000000e+00 : f32
    %21 = vector.shape_cast %12 : vector<12x1xi1> to vector<12x1xi1>
    %22 = vector.broadcast %21 : vector<12x1xi1> to vector<12x256xi1>
    %23 = vector.broadcast %cst_11 : f32 to vector<12x256xf32>
    %24 = arith.select %22, %6, %23 : vector<12x256xi1>, vector<12x256xf32>
    %25 = vector.shape_cast %24 : vector<12x256xf32> to vector<1x12x256xf32>
    %cst_12 = arith.constant dense<0.000000e+00> : vector<1xf32>
    %26 = vector.multi_reduction <add>, %25, %cst_12 [1, 2] : vector<1x12x256xf32> to vector<1xf32>
    %27 = vector.shape_cast %26 : vector<1xf32> to vector<1x1x1xf32>
    %28 = vector.extract %27[0, 0, 0] : f32 from vector<1x1x1xf32>
    %c0_13 = arith.constant 0 : index
    %c0_14 = arith.constant 0 : index
    %c0_15 = arith.constant 0 : index
    %c0_16 = arith.constant 0 : index
    %29 = vector.load %arg6[%c0_13, %c0_14, %c0_15, %c0_16] : memref<1x2x8x128xf32, #tpu.memory_space<vmem>>, vector<1x1x8x128xf32>
    %30 = vector.shape_cast %29 : vector<1x1x8x128xf32> to vector<8x128xf32>
    %31 = vector.broadcast %20 : f32 to vector<8x128xf32>
    %32 = arith.addf %30, %31 : vector<8x128xf32>
    %c0_17 = arith.constant 0 : index
    %c0_18 = arith.constant 0 : index
    %c0_19 = arith.constant 0 : index
    %c0_20 = arith.constant 0 : index
    %33 = vector.load %arg6[%c0_17, %c0_18, %c0_19, %c0_20] : memref<1x2x8x128xf32, #tpu.memory_space<vmem>>, vector<1x1x8x128xf32>
    %34 = vector.shape_cast %33 : vector<1x1x8x128xf32> to vector<8x128xf32>
    %35 = vector.shape_cast %32 : vector<8x128xf32> to vector<1x1x8x128xf32>
    tpu.vector_store %arg6[%c0_17, %c0_18, %c0_19, %c0_20], %35 {strides = array<i32>} : memref<1x2x8x128xf32, #tpu.memory_space<vmem>>, vector<1x1x8x128xf32>,
    %c0_21 = arith.constant 0 : index
    %c1 = arith.constant 1 : index
    %c0_22 = arith.constant 0 : index
    %c0_23 = arith.constant 0 : index
    %36 = vector.load %arg6[%c0_21, %c1, %c0_22, %c0_23] : memref<1x2x8x128xf32, #tpu.memory_space<vmem>>, vector<1x1x8x128xf32>
    %37 = vector.shape_cast %36 : vector<1x1x8x128xf32> to vector<8x128xf32>
    %38 = vector.broadcast %28 : f32 to vector<8x128xf32>
    %39 = arith.addf %37, %38 : vector<8x128xf32>
    %c0_24 = arith.constant 0 : index
    %c1_25 = arith.constant 1 : index
    %c0_26 = arith.constant 0 : index
    %c0_27 = arith.constant 0 : index
    %40 = vector.load %arg6[%c0_24, %c1_25, %c0_26, %c0_27] : memref<1x2x8x128xf32, #tpu.memory_space<vmem>>, vector<1x1x8x128xf32>
    %41 = vector.shape_cast %40 : vector<1x1x8x128xf32> to vector<8x128xf32>
    %42 = vector.shape_cast %39 : vector<8x128xf32> to vector<1x1x8x128xf32>
    tpu.vector_store %arg6[%c0_24, %c1_25, %c0_26, %c0_27], %42 {strides = array<i32>} : memref<1x2x8x128xf32, #tpu.memory_space<vmem>>, vector<1x1x8x128xf32>,
    return
  }
  func.func @transform_0(%arg0: i32, %arg1: i32) -> (i32, i32) {
    %c1_i32 = arith.constant 1 : i32
    %0 = arith.muli %arg0, %c1_i32 : i32
    %1 = arith.addi %0, %arg1 : i32
    %c0_i32 = arith.constant 0 : i32
    %c0_i32_0 = arith.constant 0 : i32
    return %1, %c0_i32 : i32, i32
  }
  func.func @transform_1(%arg0: i32, %arg1: i32) -> (i32, i32) {
    %c1_i32 = arith.constant 1 : i32
    %0 = arith.muli %arg0, %c1_i32 : i32
    %1 = arith.addi %0, %arg1 : i32
    %c0_i32 = arith.constant 0 : i32
    %c0_i32_0 = arith.constant 0 : i32
    return %1, %c0_i32 : i32, i32
  }
  func.func @transform_2(%arg0: i32, %arg1: i32) -> (i32, i32) {
    %c1_i32 = arith.constant 1 : i32
    %0 = arith.muli %arg0, %c1_i32 : i32
    %1 = arith.addi %0, %arg1 : i32
    %c0_i32 = arith.constant 0 : i32
    %c0_i32_0 = arith.constant 0 : i32
    return %1, %c0_i32 : i32, i32
  }
  func.func @transform_3(%arg0: i32, %arg1: i32) -> (i32, i32) {
    %c1_i32 = arith.constant 1 : i32
    %0 = arith.muli %arg0, %c1_i32 : i32
    %1 = arith.addi %0, %arg1 : i32
    %c0_i32 = arith.constant 0 : i32
    %c0_i32_0 = arith.constant 0 : i32
    return %1, %c0_i32 : i32, i32
  }
  func.func @transform_4(%arg0: i32, %arg1: i32) -> (i32, i32, i32, i32) {
    %c0_i32 = arith.constant 0 : i32
    %c0_i32_0 = arith.constant 0 : i32
    %c0_i32_1 = arith.constant 0 : i32
    %c0_i32_2 = arith.constant 0 : i32
    return %arg0, %c0_i32, %c0_i32_0, %c0_i32_1 : i32, i32, i32, i32
  }
}

</mosaic_0001>

<llo_original>
// kernel: rmse_weighted_loss.1
$region0: #{rmse_weighted_loss.1}
  #allocation0 [shape = 'u32[]', space=smem, size = 0x4, offset = 0x4, fixed_abs, tag = 'smem constant byte address 0x4 - core index']
  #allocation1 [shape = 'u32[144,128]{1,0:T(1,128)}', space=vmem, size = 0x12000, scoped, tag = 'internal scratch']
  %s0 = inlined_call_operand.vmem [shape: f32[12,256], index: 0, kind: input, shape index: {}]
  %s1 = inlined_call_operand.vmem [shape: f32[12,256], index: 1, kind: input, shape index: {}]
  %s2 = inlined_call_operand.vmem [shape: f32[12,1], index: 2, kind: input, shape index: {}]
  %s3 = inlined_call_operand.vmem [shape: f32[12,1], index: 3, kind: input, shape index: {}]
  %s4 = inlined_call_operand.vmem [shape: f32[1,2,8,128], index: 4, kind: output, shape index: {}]
  %s5 = sld [smem:[#allocation0]]
  $region30: #{rmse_weighted_loss.1} parent=0
    _
  %s7 = ssub.s32 1, %s5
  %s8 = scalar_select 0, %s7, %s5
  // Predicated region
  $region2: #{rmse_weighted_loss.1} parent=0 // pred_check
    _
  $region3: #{rmse_weighted_loss.1} parent=0 // pred_check_branch
    %10 = sbr.rel (0) target = $region5
  $region4: #{rmse_weighted_loss.1} parent=0 // pred_region
    %s11 = sadd.s32 0, 0
    %s12 = smul.u32 2, %s11
    %p13 = scmp.lt.s32.totalorder %s12, 1
    %s14 = scalar_select %p13, %s12, 1
    %s15 = smul.addr %s14, 2
    %s16 = smul.addr %s15, 8
    %s17 = scalar_lea.vmem %s0, %s16
    %s18 = sadd.s32 0, 0
    %s19 = smul.u32 2, %s18
  $region5: #{rmse_weighted_loss.1} parent=0 // pred_fallthru
    _
  // Predicated region
  $region6: #{rmse_weighted_loss.1} parent=0 // pred_check
    _
  $region7: #{rmse_weighted_loss.1} parent=0 // pred_check_branch
    %21 = sbr.rel (0) target = $region9
  $region8: #{rmse_weighted_loss.1} parent=0 // pred_region
    %s22 = sadd.s32 0, 0
    %s23 = smul.u32 2, %s22
    %p24 = scmp.lt.s32.totalorder %s23, 1
    %s25 = scalar_select %p24, %s23, 1
    %s26 = smul.addr %s25, 2
    %s27 = smul.addr %s26, 8
    %s28 = scalar_lea.vmem %s1, %s27
    %s29 = sadd.s32 0, 0
    %s30 = smul.u32 2, %s29
  $region9: #{rmse_weighted_loss.1} parent=0 // pred_fallthru
    _
  // Predicated region
  $region10: #{rmse_weighted_loss.1} parent=0 // pred_check
    _
  $region11: #{rmse_weighted_loss.1} parent=0 // pred_check_branch
    %32 = sbr.rel (0) target = $region13
  $region12: #{rmse_weighted_loss.1} parent=0 // pred_region
    %s33 = sadd.s32 0, 0
    %s34 = smul.u32 2, %s33
    %p35 = scmp.lt.s32.totalorder %s34, 1
    %s36 = scalar_select %p35, %s34, 1
    %s37 = smul.addr %s36, 8
    %s38 = scalar_lea.vmem %s2, %s37
    %s39 = sadd.s32 0, 0
    %s40 = smul.u32 2, %s39
  $region13: #{rmse_weighted_loss.1} parent=0 // pred_fallthru
    _
  // Predicated region
  $region14: #{rmse_weighted_loss.1} parent=0 // pred_check
    _
  $region15: #{rmse_weighted_loss.1} parent=0 // pred_check_branch
    %42 = sbr.rel (0) target = $region17
  $region16: #{rmse_weighted_loss.1} parent=0 // pred_region
    %s43 = sadd.s32 0, 0
    %s44 = smul.u32 2, %s43
    %p45 = scmp.lt.s32.totalorder %s44, 1
    %s46 = scalar_select %p45, %s44, 1
    %s47 = smul.addr %s46, 8
    %s48 = scalar_lea.vmem %s3, %s47
    %s49 = sadd.s32 0, 0
    %s50 = smul.u32 2, %s49
  $region17: #{rmse_weighted_loss.1} parent=0 // pred_fallthru
    _
  %s51 = sadd.s32 0, 0
  %s52 = smul.u32 2, %s51
  %p53 = scmp.lt.s32.totalorder %s52, 1
  %s54 = scalar_select %p53, %s52, 1
  %s55 = smul.addr %s54, 2
  %s56 = smul.addr %s55, 8
  %s57 = scalar_lea.vmem %s0, %s56
  %s58 = sadd.s32 0, 0
  %s59 = smul.u32 2, %s58
  %p60 = scmp.lt.s32.totalorder %s59, 1
  %s61 = scalar_select %p60, %s59, 1
  %s62 = smul.addr %s61, 2
  %s63 = smul.addr %s62, 8
  %s64 = scalar_lea.vmem %s1, %s63
  %s65 = sadd.s32 0, 0
  %s66 = smul.u32 2, %s65
  %p67 = scmp.lt.s32.totalorder %s66, 1
  %s68 = scalar_select %p67, %s66, 1
  %s69 = smul.addr %s68, 8
  %s70 = scalar_lea.vmem %s2, %s69
  %s71 = sadd.s32 0, 0
  %s72 = smul.u32 2, %s71
  %p73 = scmp.lt.s32.totalorder %s72, 1
  %s74 = scalar_select %p73, %s72, 1
  %s75 = smul.addr %s74, 8
  %s76 = scalar_lea.vmem %s3, %s75
  %s77 = sadd.s32 0, 0
  %s78 = smul.u32 2, %s77
  %p79 = scmp.lt.s32.totalorder %s78, 1
  %s80 = scalar_select %p79, %s78, 1
  %s81 = smul.addr %s80, 2
  %s82 = smul.addr %s81, 8
  %s83 = scalar_lea.vmem %s0, %s82
  %s84 = sadd.s32 0, 0
  %s85 = smul.u32 2, %s84
  %s86 = sadd.s32 0, 0
  %s87 = smul.u32 2, %s86
  %p88 = scmp.lt.s32.totalorder %s87, 1
  %s89 = scalar_select %p88, %s87, 1
  %s90 = smul.addr %s89, 2
  %s91 = smul.addr %s90, 8
  %s92 = scalar_lea.vmem %s1, %s91
  %s93 = sadd.s32 0, 0
  %s94 = smul.u32 2, %s93
  %s95 = sadd.s32 0, 0
  %s96 = smul.u32 2, %s95
  %p97 = scmp.lt.s32.totalorder %s96, 1
  %s98 = scalar_select %p97, %s96, 1
  %s99 = smul.addr %s98, 8
  %s100 = scalar_lea.vmem %s2, %s99
  %s101 = sadd.s32 0, 0
  %s102 = smul.u32 2, %s101
  %s103 = sadd.s32 0, 0
  %s104 = smul.u32 2, %s103
  %p105 = scmp.lt.s32.totalorder %s104, 1
  %s106 = scalar_select %p105, %s104, 1
  %s107 = smul.addr %s106, 8
  %s108 = scalar_lea.vmem %s3, %s107
  %s109 = sadd.s32 0, 0
  %s110 = smul.u32 2, %s109
  %p111 = scmp.eq.s32.totalorder 0, 0
  // Predicated region
  $region18: #{rmse_weighted_loss.1} parent=0 // pred_check
    %p112 = pneg %p111
  $region19: #{rmse_weighted_loss.1} parent=0 // pred_check_branch
    %114 = sbr.rel (%p112) target = $region21
  $region20: #{rmse_weighted_loss.1} parent=0 // pred_region
    %115 = vst [vmem:[%s4] sm:$0xff] 0.0
    %116 = vst [vmem:[%s4 + $0x8] sm:$0xff] 0.0
  $region21: #{rmse_weighted_loss.1} parent=0 // pred_fallthru
    _
  %v117 = vld [vmem:[%s92] sm:$0xff]
  %v118 = vld [vmem:[%s92 + $0x8] sm:$0xff]
  %v119 = vld [vmem:[%s92 + $0x10] sm:$0xf]
  %v120 = vld [vmem:[%s92 + $0x18] sm:$0xf]
  %v121 = vld [vmem:[%s83] sm:$0xff]
  %v122 = vld [vmem:[%s83 + $0x8] sm:$0xff]
  %v123 = vld [vmem:[%s83 + $0x10] sm:$0xf]
  %v124 = vld [vmem:[%s83 + $0x18] sm:$0xf]
  %v125 = vsub.f32 %v117, %v121
  %v126 = vsub.f32 %v118, %v122
  %v127 = vsub.f32 %v119, %v123
  %v128 = vsub.f32 %v120, %v124
  %v129 = vmul.f32 %v125, %v125
  %v130 = vmul.f32 %v126, %v126
  %v131 = vmul.f32 %v127, %v127
  %v132 = vmul.f32 %v128, %v128
  %v133 = vld [vmem:[%s100] sm:$0xff]
  %v134 = vld [vmem:[%s100 + $0x8] sm:$0xf]
  %vm135 = vcmp.gt.f32.partialorder %v133, 0.5
  %vm136 = vcmp.gt.f32.partialorder %v134, 0.5
  %v137 = vld [vmem:[%s108] sm:$0xff]
  %v138 = vld [vmem:[%s108 + $0x8] sm:$0xf]
  %vm139 = vcmp.gt.f32.partialorder %v137, 0.5
  %vm140 = vcmp.gt.f32.partialorder %v138, 0.5
  %v141 = vsel %vm135, 1, 0
  %v142 = vsel %vm136, 1, 0
  %143 = vset.pattern.permute.xlu0 0
  %144 = vperm.xlu0 %143, %v141
  %v145 = vpop.permute.xlu0 %144
  %146 = vset.pattern.permute.xlu0 0
  %147 = vperm.xlu0 %146, %v142
  %v148 = vpop.permute.xlu0 %147
  %vm149 = vcmp.eq.s32.totalorder %v145, 1
  %vm150 = vcmp.eq.s32.totalorder %v148, 1
  %v151 = vsel %vm149, %v129, 0.0
  %v152 = vsel %vm149, %v130, 0.0
  %v153 = vsel %vm150, %v131, 0.0
  %v154 = vsel %vm150, %v132, 0.0
  %v155 = vadd.f32 %v151, %v152
  %vm156 = vcmask 1043456
  %v157 = vsel %vm156, %v153, 0.0
  %v158 = vadd.f32 %v155, %v157
  %v159 = vsel %vm156, %v154, 0.0
  %v160 = vadd.f32 %v158, %v159
  %161 = vadd.xlane.f32.xlu0 %v160
  %v162 = vpop.xlane.xlu0 %161
  %v163 = vrot.slane %v162, 4
  %v164 = vadd.f32 %v162, %v163
  %v165 = vrot.slane %v164, 2
  %v166 = vadd.f32 %v164, %v165
  %v167 = vrot.slane %v166, 1
  %v168 = vadd.f32 %v166, %v167
  %s169 = vtos %v168
  %v170 = vsel %vm139, 1, 0
  %v171 = vsel %vm140, 1, 0
  %172 = vset.pattern.permute.xlu0 0
  %173 = vperm.xlu0 %172, %v170
  %v174 = vpop.permute.xlu0 %173
  %175 = vset.pattern.permute.xlu0 0
  %176 = vperm.xlu0 %175, %v171
  %v177 = vpop.permute.xlu0 %176
  %vm178 = vcmp.eq.s32.totalorder %v174, 1
  %vm179 = vcmp.eq.s32.totalorder %v177, 1
  %v180 = vsel %vm178, %v129, 0.0
  %v181 = vsel %vm178, %v130, 0.0
  %v182 = vsel %vm179, %v131, 0.0
  %v183 = vsel %vm179, %v132, 0.0
  %v184 = vadd.f32 %v180, %v181
  %v185 = vsel %vm156, %v182, 0.0
  %v186 = vadd.f32 %v184, %v185
  %v187 = vsel %vm156, %v183, 0.0
  %v188 = vadd.f32 %v186, %v187
  %189 = vadd.xlane.f32.xlu0 %v188
  %v190 = vpop.xlane.xlu0 %189
  %v191 = vrot.slane %v190, 4
  %v192 = vadd.f32 %v190, %v191
  %v193 = vrot.slane %v192, 2
  %v194 = vadd.f32 %v192, %v193
  %v195 = vrot.slane %v194, 1
  %v196 = vadd.f32 %v194, %v195
  %s197 = vtos %v196
  %v198 = vld [vmem:[%s4] sm:$0xff]
  %v199 = vstv %s169
  %v200 = vadd.f32 %v198, %v199
  %201 = vst [vmem:[%s4] sm:$0xff] %v200
  %s202 = scalar_lea.vmem %s4, 8
  %v203 = vld [vmem:[%s202] sm:$0xff]
  %v204 = vstv %s197
  %v205 = vadd.f32 %v203, %v204
  %206 = vst [vmem:[%s202] sm:$0xff] %v205
  // Predicated region
  $region22: #{rmse_weighted_loss.1} parent=0 // pred_check
    _
  $region23: #{rmse_weighted_loss.1} parent=0 // pred_check_branch
    %208 = sbr.rel (0) target = $region25
  $region24: #{rmse_weighted_loss.1} parent=0 // pred_region
    _
  $region25: #{rmse_weighted_loss.1} parent=0 // pred_fallthru
    _
  // Predicated region
  $region26: #{rmse_weighted_loss.1} parent=0 // pred_check
    _
  $region27: #{rmse_weighted_loss.1} parent=0 // pred_check_branch
    %210 = sbr.rel (0) target = $region29
  $region28: #{rmse_weighted_loss.1} parent=0 // pred_region
    _
  $region29: #{rmse_weighted_loss.1} parent=0 // pred_fallthru
    _

</llo_original>
